<compile_context>
chip_gen: v7x
topology: tpu7x:2x2x1
jax: 0.10.0
libtpu: 0.0.40
codegen_flags: <defaults>
</compile_context>

<pallas_src>
import functools

import jax
import jax.numpy as jnp
from jax.experimental import pallas as pl
from jax.experimental.pallas import tpu as pltpu


def _round_up(x, m):
    return ((x + m - 1) // m) * m


def _transform_embedding_kernel(seed_ref, x_ref, w_ref, b_ref, out_ref, *,
                                dropout_p, training):
    # seed_ref: (1,) int32 in SMEM (scalar prefetch)
    # x_ref   : (TM, from_dim) gathered embeddings tile (native dtype)
    # w_ref   : (from_dim, TN) transposed linear weight slab
    # b_ref   : (1,  TN)       bias slab
    # out_ref : (TM, TN)
    y = jnp.dot(x_ref[...], w_ref[...], preferred_element_type=jnp.float32)
    y = y + b_ref[...].astype(jnp.float32)
    y = y.astype(out_ref.dtype)  # mask/scale in the output dtype (bf16 on v6e/v7x)

    if training and dropout_p > 0.0:
        # Runtime seed + per-tile stream: no recompile per step, distinct mask per tile.
        pltpu.prng_seed(seed_ref[0], pl.program_id(0), pl.program_id(1))
        bits = pltpu.bitcast(pltpu.prng_random_bits(y.shape), jnp.uint32)
        thresh = jnp.uint32(min(int(round(dropout_p * 4294967296.0)), 4294967295))
        keep = bits >= thresh                      # P(keep) = 1 - dropout_p
        scale = jnp.asarray(1.0 / (1.0 - dropout_p), dtype=y.dtype)
        y = jnp.where(keep, y * scale, jnp.zeros((), y.dtype))

    out_ref[...] = y


def transform_embedding(indexes, emb_table, w_t, bias, *,
                        dropout_p=0.1, training=False, seed=0,
                        tm=512, compute_dtype=None):
    """indexes: (B, S) int; emb_table: (V, from_dim); w_t: (from_dim, to_dim);
    bias: (to_dim,). Returns (B, S, to_dim)."""
    B, S = indexes.shape
    N = B * S
    _, from_dim = emb_table.shape
    to_dim = w_t.shape[1]
    out_dtype = emb_table.dtype

    # --- Embedding gather hoisted to XLA: dense (N, from_dim) activation slab. ---
    x = jnp.take(emb_table, indexes.reshape(N).astype(jnp.int32), axis=0)

    if compute_dtype is not None:
        x = x.astype(compute_dtype)
        w_t = w_t.astype(compute_dtype)

    b2 = bias.reshape(1, to_dim)  # metadata-only view, no copy

    # Token tile (sublane multiple of 8); no M padding -- Pallas handles partial tiles.
    tm_eff = min(tm, _round_up(N, 8))
    grid_m = pl.cdiv(N, tm_eff)

    # Output-feature tile: keep the whole to_dim resident unless the projection is
    # large and 128-aligned, in which case tile it so only a (from_dim, tn) weight
    # slab lives in VMEM and the second grid axis can shard across TensorCores.
    if to_dim % 128 == 0 and to_dim > 1024:
        tn = 512
    else:
        tn = to_dim
    grid_n = pl.cdiv(to_dim, tn)

    if grid_n == 1:
        # Constant index_map -> single-buffer the resident weight / bias.
        w_spec = pl.BlockSpec((from_dim, tn), lambda i, j, s: (0, 0),
                              pipeline_mode=pl.Buffered(1))
        b_spec = pl.BlockSpec((1, tn), lambda i, j, s: (0, 0),
                              pipeline_mode=pl.Buffered(1))
    else:
        w_spec = pl.BlockSpec((from_dim, tn), lambda i, j, s: (0, j))
        b_spec = pl.BlockSpec((1, tn), lambda i, j, s: (0, j))

    kernel = functools.partial(_transform_embedding_kernel,
                               dropout_p=float(dropout_p),
                               training=bool(training))

    x_sz = jnp.dtype(x.dtype).itemsize
    w_sz = jnp.dtype(w_t.dtype).itemsize
    b_sz = jnp.dtype(bias.dtype).itemsize
    o_sz = jnp.dtype(out_dtype).itemsize

    cost = pl.CostEstimate(
        flops=2 * N * from_dim * to_dim,
        transcendentals=0,
        bytes_accessed=(N * from_dim * x_sz + from_dim * to_dim * w_sz
                        + to_dim * b_sz + N * to_dim * o_sz),
    )

    # VMEM budget: resident weight/bias (+buffering) + double-buffered activation and
    # output tiles + f32 accumulator, with generous headroom.
    wb_buf = 1 if grid_n == 1 else 2
    need = (from_dim * tn * w_sz * wb_buf + tn * b_sz * wb_buf
            + 2 * tm_eff * from_dim * x_sz
            + 2 * tm_eff * tn * o_sz
            + tm_eff * tn * 4)
    vmem_limit = int(max(32 * 2**20, min(2 * need + (4 << 20), 128 * 2**20)))

    seed_arr = jnp.asarray([seed], dtype=jnp.int32)

    out = pl.pallas_call(
        kernel,
        out_shape=jax.ShapeDtypeStruct((N, to_dim), out_dtype),
        grid_spec=pltpu.PrefetchScalarGridSpec(
            num_scalar_prefetch=1,
            grid=(grid_m, grid_n),
            in_specs=[
                pl.BlockSpec((tm_eff, from_dim), lambda i, j, s: (i, 0)),  # tokens
                w_spec,                                                    # weight
                b_spec,                                                    # bias
            ],
            out_specs=pl.BlockSpec((tm_eff, tn), lambda i, j, s: (i, j)),
        ),
        compiler_params=pltpu.CompilerParams(
            dimension_semantics=("parallel", "parallel"),
            vmem_limit_bytes=vmem_limit),
        cost_estimate=cost,
    )(seed_arr, x, w_t, b2)

    # No slicing needed: output is already (N, to_dim).
    return out.reshape(B, S, to_dim)


if __name__ == "__main__":
    # Small, deterministic setup consistent with the module:
    #   nn.Embedding(vocab, from_dim), nn.Linear(from_dim, to_dim), Dropout(0.1)
    B, S = 2, 8
    vocab, from_dim, to_dim = 64, 32, 64

    key = jax.random.PRNGKey(0)
    k_emb, k_w, k_b, k_idx = jax.random.split(key, 4)

    emb_table = jax.random.normal(k_emb, (vocab, from_dim), dtype=jnp.float32)
    # PyTorch Linear stores weight as (to_dim, from_dim); we pass it transposed.
    w = jax.random.normal(k_w, (to_dim, from_dim), dtype=jnp.float32) * 0.05
    w_t = w.T
    bias = jax.random.normal(k_b, (to_dim,), dtype=jnp.float32) * 0.01
    indexes = jax.random.randint(k_idx, (B, S), 0, vocab, dtype=jnp.int32)

    # Eval-mode forward (dropout == identity), matching module.eval() semantics.
    out = transform_embedding(indexes, emb_table, w_t, bias, training=False)
    out = jax.block_until_ready(out)

    # Pure-JAX reference check.
    ref = (jnp.take(emb_table, indexes.reshape(-1), axis=0) @ w_t + bias
           ).reshape(B, S, to_dim)
    assert out.shape == (B, S, to_dim)
    assert jnp.allclose(out, ref, atol=2e-3, rtol=2e-3)

    # Training-mode path uses the TPU hardware PRNG; exercise it only when the
    # default backend is a real TPU (interpret/CPU harnesses have no prng lowering).
    if jax.default_backend() == "tpu":
        out_tr = transform_embedding(indexes, emb_table, w_t, bias,
                                     training=True, dropout_p=0.1, seed=1234)
        out_tr = jax.block_until_ready(out_tr)
        assert out_tr.shape == (B, S, to_dim)
        assert bool(jnp.all(jnp.isfinite(out_tr)))

    print("KERNEL_OK")
</pallas_src>

<mosaic_0001>
module attributes {stable_mosaic.version = 11 : i64} {
  func.func @_transform_embedding_kernel(%arg0: i32, %arg1: i32, %arg2: memref<1xi32, #tpu.memory_space<smem>>, %arg3: memref<16x32xf32, #tpu.memory_space<vmem>>, %arg4: memref<32x64xf32, #tpu.memory_space<vmem>>, %arg5: memref<1x64xf32, #tpu.memory_space<vmem>>, %arg6: memref<16x64xf32, #tpu.memory_space<vmem>>) attributes {dimension_semantics = [#tpu.dimension_semantics<parallel>, #tpu.dimension_semantics<parallel>], iteration_bounds = array<i64: 1, 1>, scalar_prefetch = 1 : i64, scratch_operands = 0 : i64, tpu.core_type = #tpu.core_type<tc>, window_params = [{transform_indices = @transform_0, window_bounds = array<i64: 16, 32>}, {pipeline_mode = #tpu.pipeline_mode<synchronous>, transform_indices = @transform_1, window_bounds = array<i64: 32, 64>}, {pipeline_mode = #tpu.pipeline_mode<synchronous>, transform_indices = @transform_2, window_bounds = array<i64: 1, 64>}, {transform_indices = @transform_3, window_bounds = array<i64: 16, 64>}]} {
    %c0 = arith.constant 0 : index
    %c0_0 = arith.constant 0 : index
    %0 = vector.load %arg3[%c0, %c0_0] : memref<16x32xf32, #tpu.memory_space<vmem>>, vector<16x32xf32>
    %c0_1 = arith.constant 0 : index
    %c0_2 = arith.constant 0 : index
    %1 = vector.load %arg4[%c0_1, %c0_2] : memref<32x64xf32, #tpu.memory_space<vmem>>, vector<32x64xf32>
    %cst = arith.constant dense<0.000000e+00> : vector<16x64xf32>
    %2 = tpu.matmul %0, %1, %cst {dimension_numbers = #tpu.dot_dimension_numbers<[1], [0], [0], [1], [0, 0, 1, 1], [], []>} : vector<16x32xf32>, vector<32x64xf32>, vector<16x64xf32> -> vector<16x64xf32>
    %c0_3 = arith.constant 0 : index
    %c0_4 = arith.constant 0 : index
    %3 = vector.load %arg5[%c0_3, %c0_4] : memref<1x64xf32, #tpu.memory_space<vmem>>, vector<1x64xf32>
    %4 = vector.broadcast %3 : vector<1x64xf32> to vector<16x64xf32>
    %5 = arith.addf %2, %4 : vector<16x64xf32>
    %c0_5 = arith.constant 0 : index
    %c0_6 = arith.constant 0 : index
    %6 = vector.load %arg6[%c0_5, %c0_6] : memref<16x64xf32, #tpu.memory_space<vmem>>, vector<16x64xf32>
    tpu.vector_store %arg6[%c0_5, %c0_6], %5 {strides = array<i32>} : memref<16x64xf32, #tpu.memory_space<vmem>>, vector<16x64xf32>,
    return
  }
  func.func @transform_0(%arg0: i32, %arg1: i32, %arg2: memref<1xi32, #tpu.memory_space<smem>>) -> (i32, i32) {
    %c0_i32 = arith.constant 0 : i32
    %c0_i32_0 = arith.constant 0 : i32
    return %arg0, %c0_i32 : i32, i32
  }
  func.func @transform_1(%arg0: i32, %arg1: i32, %arg2: memref<1xi32, #tpu.memory_space<smem>>) -> (i32, i32) {
    %c0_i32 = arith.constant 0 : i32
    %c0_i32_0 = arith.constant 0 : i32
    %c0_i32_1 = arith.constant 0 : i32
    return %c0_i32, %c0_i32_0 : i32, i32
  }
  func.func @transform_2(%arg0: i32, %arg1: i32, %arg2: memref<1xi32, #tpu.memory_space<smem>>) -> (i32, i32) {
    %c0_i32 = arith.constant 0 : i32
    %c0_i32_0 = arith.constant 0 : i32
    %c0_i32_1 = arith.constant 0 : i32
    return %c0_i32, %c0_i32_0 : i32, i32
  }
  func.func @transform_3(%arg0: i32, %arg1: i32, %arg2: memref<1xi32, #tpu.memory_space<smem>>) -> (i32, i32) {
    %c0_i32 = arith.constant 0 : i32
    return %arg0, %arg1 : i32, i32
  }
}

</mosaic_0001>

<llo_original>
// kernel: tpu_custom_call.1
$region0: #{tpu_custom_call.1}
  #allocation0 [shape = 'u32[]', space=smem, size = 0x4, offset = 0x4, fixed_abs, tag = 'smem constant byte address 0x4 - core index']
  #allocation1 [shape = 'u32[144,128]{1,0:T(1,128)}', space=vmem, size = 0x12000, scoped, tag = 'internal scratch']
  #allocation2 [shape = 's32[1]{0}', space=sflag, size = 0x4, scoped, tag = 'scoped memory for tpu_custom_call.1']
  #allocation3 [shape = 's32[1]{0:T(128)S(6)}', space=smem, size = 0x200, scoped, tag = 'prefetched SMEM operand 0']
  %s0 = inlined_call_operand.<no memory space> [shape: s32[1], index: 0, kind: input, shape index: {}]
  %s1 = inlined_call_operand.hbm [shape: f32[16,32], index: 1, kind: input, shape index: {}]
  %s2 = inlined_call_operand.hbm [shape: f32[32,64], index: 2, kind: input, shape index: {}]
  %s3 = inlined_call_operand.vmem [shape: f32[1,64], index: 3, kind: input, shape index: {}]
  %s4 = inlined_call_operand.hbm [shape: f32[16,64], index: 4, kind: output, shape index: {}]
  %s5 = sld [smem:[#allocation0]]
  $region30: #{tpu_custom_call.1} parent=0
    _
  %s7 = ssub.s32 1, %s5
  %s8 = scalar_select 0, %s7, %s5
  %9 = sst [smem:[#allocation3]] %s0
  $region1: #{tpu_custom_call.1} parent=0
    #allocation4 [shape = 'u8[8192]{0}', space=vmem, size = 0x2000, scoped, tag = 'input window, operand 1, single buffered']
    #allocation5 [shape = 's32[1]{0}', space=sflag, size = 0x4, scoped, tag = 'scoped memory for tpu_custom_call.1']
    #allocation6 [shape = 's32[1]{0}', space=sflag, size = 0x4, scoped, tag = 'scoped memory for tpu_custom_call.1']
    #allocation7 [shape = 'u8[16384]{0}', space=vmem, size = 0x4000, scoped, tag = 'input window, operand 2, single buffered']
    #allocation8 [shape = 's32[1]{0}', space=sflag, size = 0x4, scoped, tag = 'scoped memory for tpu_custom_call.1']
    #allocation9 [shape = 'u8[8192]{0}', space=vmem, size = 0x2000, scoped, tag = 'output window, operand 0, single buffered']
    %10 = vsyncpa [#allocation5], 0
    %11 = vsyncpa [#allocation8], 0
    %12 = vsyncpa [#allocation6], 0
    // Predicated region
    $region2: #{tpu_custom_call.1} parent=1 // pred_check
      _
    $region3: #{tpu_custom_call.1} parent=1 // pred_check_branch
      %14 = sbr.rel (0) target = $region5
    $region4: #{tpu_custom_call.1} parent=1 // pred_region
      %s16 = ssub.s32 256, 256
      %17 = vsyncadd [#allocation5], %s16
      %s18 = sshll.u32 [#allocation4], 4
      %s19 = int_to_ptr.vmem [resolvable:$true] %s18
      %24 = dma.hbm_to_vmem [thread:$0]  %s1, 256, %s19, [#allocation5], 128, 128, 8
    $region5: #{tpu_custom_call.1} parent=1 // pred_fallthru
      _
    // Predicated region
    $region6: #{tpu_custom_call.1} parent=1 // pred_check
      _
    $region7: #{tpu_custom_call.1} parent=1 // pred_check_branch
      %26 = sbr.rel (0) target = $region9
    $region8: #{tpu_custom_call.1} parent=1 // pred_region
      %s28 = ssub.s32 512, 512
      %29 = vsyncadd [#allocation8], %s28
      %s30 = sshll.u32 [#allocation7], 4
      %s31 = int_to_ptr.vmem [resolvable:$true] %s30
      %36 = dma.hbm_to_vmem [thread:$0]  %s2, 512, %s31, [#allocation8], 128, 128, 8
    $region9: #{tpu_custom_call.1} parent=1 // pred_fallthru
      _
    // Predicated region
    $region10: #{tpu_custom_call.1} parent=1 // pred_check
      _
    $region11: #{tpu_custom_call.1} parent=1 // pred_check_branch
      %38 = sbr.rel (0) target = $region13
    $region12: #{tpu_custom_call.1} parent=1 // pred_region
      _
    $region13: #{tpu_custom_call.1} parent=1 // pred_fallthru
      _
    // Predicated region
    $region14: #{tpu_custom_call.1} parent=1 // pred_check
      _
    $region15: #{tpu_custom_call.1} parent=1 // pred_check_branch
      %40 = sbr.rel (0) target = $region17
    $region16: #{tpu_custom_call.1} parent=1 // pred_region
      %41 = dma.done [#allocation5], 256
    $region17: #{tpu_custom_call.1} parent=1 // pred_fallthru
      _
    // Predicated region
    $region18: #{tpu_custom_call.1} parent=1 // pred_check
      _
    $region19: #{tpu_custom_call.1} parent=1 // pred_check_branch
      %43 = sbr.rel (0) target = $region21
    $region20: #{tpu_custom_call.1} parent=1 // pred_region
      %44 = dma.done [#allocation8], 512
    $region21: #{tpu_custom_call.1} parent=1 // pred_fallthru
      _
    %v45 = vld [vmem:[#allocation4] sm:$0xff]
    %v46 = vld [vmem:[#allocation4 + $0x8] sm:$0xff]
    %v47 = vld [vmem:[#allocation7] sm:$0xff]
    %v48 = vld [vmem:[#allocation7 + $0x8] sm:$0xff]
    %v49 = vld [vmem:[#allocation7 + $0x10] sm:$0xff]
    %v50 = vld [vmem:[#allocation7 + $0x18] sm:$0xff]
    %v51 = vld [vmem:[%s3] sm:$0x1]
    %v53 = vlaneseq
    %v54 = vshrl.u32 %v53, 7
    %v55 = vsub.s32 0, %v54
    %v56 = vrot.slane %v51, %v55
    %vm58 = vcmask 261120
    %v60 = vsel %vm58, %v45, 0
    %v63 = vsel %vm58, %v46, 0
    %65 = vmatprep.subr.mxu0 0.0
    %66 = vmatpush1.msra.mxu0 %v47
    %67 = vmatprep.subr.mxu0 0.0
    %68 = vmatpush1.msra.mxu0 %v48
    %69 = vmatprep.subr.mxu0 0.0
    %70 = vmatpush1.msra.mxu0 %v49
    %71 = vmatprep.subr.mxu0 0.0
    %72 = vmatpush1.msra.mxu0 %v50
    %73 = vmatprep.subr.mxu0 0.0
    %74 = vmatpush1.msra.mxu0 0.0
    %75 = vmatprep.subr.mxu0 0.0
    %76 = vmatpush1.msra.mxu0 0.0
    %77 = vmatprep.subr.mxu0 0.0
    %78 = vmatpush1.msra.mxu0 0.0
    %79 = vmatprep.subr.mxu0 0.0
    %80 = vmatpush1.msra.mxu0 0.0
    %81 = vmatprep.subr.mxu0 0.0
    %82 = vmatpush1.msra.mxu0 0.0
    %83 = vmatprep.subr.mxu0 0.0
    %84 = vmatpush1.msra.mxu0 0.0
    %85 = vmatprep.subr.mxu0 0.0
    %86 = vmatpush1.msra.mxu0 0.0
    %87 = vmatprep.subr.mxu0 0.0
    %88 = vmatpush1.msra.mxu0 0.0
    %89 = vmatprep.subr.mxu0 0.0
    %90 = vmatpush1.msra.mxu0 0.0
    %91 = vmatprep.subr.mxu0 0.0
    %92 = vmatpush1.msra.mxu0 0.0
    %93 = vmatprep.subr.mxu0 0.0
    %94 = vmatpush1.msra.mxu0 0.0
    %95 = vmatprep.subr.mxu0 0.0
    %96 = vmatpush1.msra.mxu0 0.0
    %97 = vmatprep.subr.mxu0 0.0
    %98 = vmatpush1.msra.mxu0 0.0
    %99 = vmatprep.subr.mxu0 0.0
    %100 = vmatpush1.msra.mxu0 0.0
    %101 = vmatprep.subr.mxu0 0.0
    %102 = vmatpush1.msra.mxu0 0.0
    %103 = vmatprep.subr.mxu0 0.0
    %104 = vmatpush1.msra.mxu0 0.0
    %105 = vmatprep.subr.mxu0 0.0
    %106 = vmatpush1.msra.mxu0 0.0
    %107 = vmatprep.subr.mxu0 0.0
    %108 = vmatpush1.msra.mxu0 0.0
    %109 = vmatprep.subr.mxu0 0.0
    %110 = vmatpush1.msra.mxu0 0.0
    %111 = vmatprep.subr.mxu0 0.0
    %112 = vmatpush1.msra.mxu0 0.0
    %113 = vmatprep.subr.mxu0 0.0
    %114 = vmatpush1.msra.mxu0 0.0
    %115 = vmatprep.subr.mxu0 0.0
    %116 = vmatpush1.msra.mxu0 0.0
    %117 = vmatprep.subr.mxu0 0.0
    %118 = vmatpush1.msra.mxu0 0.0
    %119 = vmatprep.subr.mxu0 0.0
    %120 = vmatpush1.msra.mxu0 0.0
    %121 = vmatprep.subr.mxu0 0.0
    %122 = vmatpush1.msra.mxu0 0.0
    %123 = vmatprep.subr.mxu0 0.0
    %124 = vmatpush1.msra.mxu0 0.0
    %125 = vmatprep.subr.mxu0 0.0
    %126 = vmatpush1.msra.mxu0 0.0
    %127 = vmatprep.subr.mxu0 0.0
    %128 = vmatpush1.msra.mxu0 0.0
    %129 = vmatprep.mubr.f32.mxu0 0.0
    %130 = vmatmul.mubr.f32.gmra.mrb[0].mxu0 %v60
    %v131 = vpop.f32.mrb[0].mxu0
    %v132 = vadd.f32 %v56, %v131
    %v133 = vpop.f32.mrb[0].mxu0
    %134 = vmatprep.mubr.f32.mxu0 0.0
    %135 = vmatmul.mubr.f32.gmra.mrb[0].mxu0 %v63
    %v136 = vpop.f32.mrb[0].mxu0
    %v137 = vadd.f32 %v56, %v136
    %v138 = vpop.f32.mrb[0].mxu0
    %139 = vdwg.mxu0
    %vm140 = vcmask 523264
    %141 = vst.msk [vmem:[#allocation9] sm:$0xff] %vm140, %v132
    %142 = vst.msk [vmem:[#allocation9 + $0x8] sm:$0xff] %vm140, %v137
    // Predicated region
    $region22: #{tpu_custom_call.1} parent=1 // pred_check
      _
    $region23: #{tpu_custom_call.1} parent=1 // pred_check_branch
      %144 = sbr.rel (0) target = $region25
    $region24: #{tpu_custom_call.1} parent=1 // pred_region
      %s146 = ssub.s32 256, 256
      %147 = vsyncadd [#allocation6], %s146
      %s148 = sshll.u32 [#allocation9], 4
      %s149 = int_to_ptr.vmem [resolvable:$true] %s148
      %154 = dma.vmem_to_hbm [thread:$0]  %s149, 256, %s4, [#allocation6], 128, 128, 8
    $region25: #{tpu_custom_call.1} parent=1 // pred_fallthru
      _
    // Predicated region
    $region26: #{tpu_custom_call.1} parent=1 // pred_check
      _
    $region27: #{tpu_custom_call.1} parent=1 // pred_check_branch
      %156 = sbr.rel (0) target = $region29
    $region28: #{tpu_custom_call.1} parent=1 // pred_region
      %157 = dma.done [#allocation6], 256
    $region29: #{tpu_custom_call.1} parent=1 // pred_fallthru
      _
    %158 = vsyncpa [#allocation5], 1
    %159 = vsyncpa [#allocation8], 1
    %160 = vsyncpa [#allocation6], 1

</llo_original>
